<compile_context>
chip_gen: v6e
topology: v6e:2x2x1
jax: 0.10.0
libtpu: 0.0.40
codegen_flags: <defaults>
</compile_context>

<pallas_src>
import jax
import jax.numpy as jnp
from jax.experimental import pallas as pl
from jax.experimental.pallas import tpu as pltpu

ALPHA = 0.1      # negative_slope of leaky_relu (module default)
OUT = 4          # logical number of Q-values
OUT_PAD = 128    # lane-dense padded output width


def _qnet_kernel(x_ref, m_ref, bct_ref, w1_ref, b1_ref, w2_ref, b2_ref,
                 w3_ref, b3_ref, out_ref):
    # conv_transpose (C_in=1, k=stride=2) expressed as x_flat @ M + bias (f32).
    h0 = jnp.dot(x_ref[...], m_ref[...],
                 preferred_element_type=jnp.float32) + bct_ref[...]
    # fc1 (bf16 weights, f32 accumulate) + leaky_relu (f32 on the VPU).
    h1 = jnp.dot(h0.astype(jnp.bfloat16), w1_ref[...],
                 preferred_element_type=jnp.float32) + b1_ref[...]
    h1 = jnp.where(h1 > 0, h1, ALPHA * h1)
    # fc2 (bf16 weights, f32 accumulate) + leaky_relu.
    h2 = jnp.dot(h1.astype(jnp.bfloat16), w2_ref[...],
                 preferred_element_type=jnp.float32) + b2_ref[...]
    h2 = jnp.where(h2 > 0, h2, ALPHA * h2)
    # fc3, padded to 128 output lanes -> unmasked lane-dense store.
    h3 = jnp.dot(h2, w3_ref[...],
                 preferred_element_type=jnp.float32) + b3_ref[...]
    out_ref[...] = jnp.where(h3 > 0, h3, ALPHA * h3)


def init_params(key):
    """Deterministic synthetic init matching the module's parameter shapes."""
    k1, k2, k3, k4, k5 = jax.random.split(key, 5)
    return {
        # nn.Linear weights are (out, in); normal(0, 0.1), bias 0 (per __init__)
        "w1": 0.1 * jax.random.normal(k1, (400, 192), jnp.float32),
        "b1": jnp.zeros((400,), jnp.float32),
        "w2": 0.1 * jax.random.normal(k2, (50, 400), jnp.float32),
        "b2": jnp.zeros((50,), jnp.float32),
        "w3": 0.1 * jax.random.normal(k3, (4, 50), jnp.float32),
        "b3": jnp.zeros((4,), jnp.float32),
        # ConvTranspose2d(1, 3, kernel_size=2, stride=2): weight (C_in, C_out, kH, kW)
        "ct_w": 0.1 * jax.random.normal(k4, (1, 3, 2, 2), jnp.float32),
        "ct_b": 0.1 * jax.random.normal(k5, (3,), jnp.float32),
    }


def _conv_transpose_as_matrix(ct_w):
    """Build M (16, 192) s.t. flatten_NCHW(conv_transpose(x)) == x_flat @ M."""
    W = ct_w[0]  # (3, 2, 2) = (c_out, a, b)
    eye4 = jnp.eye(4, dtype=jnp.float32)
    # M7[i, j, c, p, a, q, b] = delta(i,p) * delta(j,q) * W[c, a, b]
    M7 = jnp.einsum("ip,jq,cab->ijcpaqb", eye4, eye4, W)
    # input flat index = i*4 + j ; output flat index = c*64 + (2p+a)*8 + (2q+b)
    return M7.reshape(16, 192)


def prepare_params(params):
    """One-time parameter preprocessing, hoisted out of the per-step forward."""
    m = _conv_transpose_as_matrix(params["ct_w"])                  # (16, 192) f32
    bct = jnp.repeat(params["ct_b"], 64).reshape(1, 192)           # (1, 192)  f32
    w1t = params["w1"].T.astype(jnp.bfloat16)                      # (192, 400) bf16
    b1 = params["b1"].reshape(1, 400).astype(jnp.float32)
    w2t = params["w2"].T.astype(jnp.bfloat16)                      # (400, 50) bf16
    b2 = params["b2"].reshape(1, 50).astype(jnp.float32)
    # Lane-dense fc3: pad output width 4 -> 128 with zero columns.
    w3t = jnp.zeros((50, OUT_PAD), jnp.float32).at[:, :OUT].set(params["w3"].T)
    b3 = jnp.zeros((1, OUT_PAD), jnp.float32).at[:, :OUT].set(params["b3"])
    return {"m": m, "bct": bct, "w1t": w1t, "b1": b1,
            "w2t": w2t, "b2": b2, "w3t": w3t, "b3": b3}


def _round_up(x, mult):
    return (x + mult - 1) // mult * mult


@jax.jit
def forward_pallas(x, prepped):
    n = x.shape[0]
    x_flat = x.reshape(n, 16).astype(jnp.float32)                  # (N, 16)

    # Pad batch to the f32 sublane multiple (8); tile big batches at 256 rows
    # so the batch grid axis can be sharded across TensorCores (v7x).
    bm = 256 if n > 256 else _round_up(n, 8)
    n_pad = _round_up(n, bm)
    if n_pad != n:
        x_flat = jnp.pad(x_flat, ((0, n_pad - n), (0, 0)))

    args = [x_flat, prepped["m"], prepped["bct"],
            prepped["w1t"], prepped["b1"],
            prepped["w2t"], prepped["b2"],
            prepped["w3t"], prepped["b3"]]

    def weight_spec(a):
        return pl.BlockSpec(a.shape, lambda i: (0, 0))

    in_specs = [pl.BlockSpec((bm, 16), lambda i: (i, 0))] + \
               [weight_spec(a) for a in args[1:]]

    out_full = pl.pallas_call(
        _qnet_kernel,
        out_shape=jax.ShapeDtypeStruct((n_pad, OUT_PAD), jnp.float32),
        grid=(n_pad // bm,),
        in_specs=in_specs,
        out_specs=pl.BlockSpec((bm, OUT_PAD), lambda i: (i, 0)),
        compiler_params=pltpu.CompilerParams(
            dimension_semantics=("parallel",)),
    )(*args)

    return out_full[:n, :OUT]


def forward_reference(x, params):
    """Pure-JAX f32 reference (explicit conv-transpose scatter), for validation."""
    n = x.shape[0]
    W = params["ct_w"][0]                                          # (3, 2, 2)
    xs = x[:, 0]                                                   # (N, 4, 4)
    # out[n, c, i, a, j, b] = x[n, i, j] * W[c, a, b]
    y = xs[:, None, :, None, :, None] * W[None, :, None, :, None, :]
    y = y + params["ct_b"][None, :, None, None, None, None]
    out0 = y.reshape(n, 3, 8, 8).reshape(n, 192)
    lrelu = lambda v: jnp.where(v > 0, v, ALPHA * v)
    h1 = lrelu(out0 @ params["w1"].T + params["b1"])
    h2 = lrelu(h1 @ params["w2"].T + params["b2"])
    return lrelu(h2 @ params["w3"].T + params["b3"])


if __name__ == "__main__":
    key = jax.random.PRNGKey(0)
    kx, kp = jax.random.split(key)
    # input_size is architecturally fixed at (1, 4, 4); batch = 2
    x = jax.random.normal(kx, (2, 1, 4, 4), jnp.float32)
    params = init_params(kp)
    prepped = prepare_params(params)   # one-time prep; reused every forward

    out = forward_pallas(x, prepped)
    out = jax.block_until_ready(out)

    ref = forward_reference(x, params)
    assert out.shape == (2, 4)
    # fc1/fc2 run with bf16 weights on the MXU (f32 accumulate) -> loose tol.
    assert jnp.allclose(out, ref, atol=2e-2, rtol=2e-2), "mismatch vs reference"
    print("KERNEL_OK")
</pallas_src>

<mosaic_0001>
module attributes {stable_mosaic.version = 11 : i64} {
  func.func @_qnet_kernel(%arg0: i32, %arg1: memref<8x16xf32, #tpu.memory_space<vmem>>, %arg2: memref<16x192xf32, #tpu.memory_space<vmem>>, %arg3: memref<1x192xf32, #tpu.memory_space<vmem>>, %arg4: memref<192x400xbf16, #tpu.memory_space<vmem>>, %arg5: memref<1x400xf32, #tpu.memory_space<vmem>>, %arg6: memref<400x50xbf16, #tpu.memory_space<vmem>>, %arg7: memref<1x50xf32, #tpu.memory_space<vmem>>, %arg8: memref<50x128xf32, #tpu.memory_space<vmem>>, %arg9: memref<1x128xf32, #tpu.memory_space<vmem>>, %arg10: memref<8x128xf32, #tpu.memory_space<vmem>>) attributes {dimension_semantics = [#tpu.dimension_semantics<parallel>], iteration_bounds = array<i64: 1>, scalar_prefetch = 0 : i64, scratch_operands = 0 : i64, tpu.core_type = #tpu.core_type<tc>, window_params = [{transform_indices = @transform_0, window_bounds = array<i64: 8, 16>}, {pipeline_mode = #tpu.pipeline_mode<synchronous>, transform_indices = @transform_1, window_bounds = array<i64: 16, 192>}, {pipeline_mode = #tpu.pipeline_mode<synchronous>, transform_indices = @transform_2, window_bounds = array<i64: 1, 192>}, {pipeline_mode = #tpu.pipeline_mode<synchronous>, transform_indices = @transform_3, window_bounds = array<i64: 192, 400>}, {pipeline_mode = #tpu.pipeline_mode<synchronous>, transform_indices = @transform_4, window_bounds = array<i64: 1, 400>}, {pipeline_mode = #tpu.pipeline_mode<synchronous>, transform_indices = @transform_5, window_bounds = array<i64: 400, 50>}, {pipeline_mode = #tpu.pipeline_mode<synchronous>, transform_indices = @transform_6, window_bounds = array<i64: 1, 50>}, {pipeline_mode = #tpu.pipeline_mode<synchronous>, transform_indices = @transform_7, window_bounds = array<i64: 50, 128>}, {pipeline_mode = #tpu.pipeline_mode<synchronous>, transform_indices = @transform_8, window_bounds = array<i64: 1, 128>}, {transform_indices = @transform_9, window_bounds = array<i64: 8, 128>}]} {
    %c0 = arith.constant 0 : index
    %c0_0 = arith.constant 0 : index
    %0 = vector.load %arg1[%c0, %c0_0] : memref<8x16xf32, #tpu.memory_space<vmem>>, vector<8x16xf32>
    %c0_1 = arith.constant 0 : index
    %c0_2 = arith.constant 0 : index
    %1 = vector.load %arg2[%c0_1, %c0_2] : memref<16x192xf32, #tpu.memory_space<vmem>>, vector<16x192xf32>
    %cst = arith.constant dense<0.000000e+00> : vector<8x192xf32>
    %2 = tpu.matmul %0, %1, %cst {dimension_numbers = #tpu.dot_dimension_numbers<[1], [0], [0], [1], [0, 0, 1, 1], [], []>} : vector<8x16xf32>, vector<16x192xf32>, vector<8x192xf32> -> vector<8x192xf32>
    %c0_3 = arith.constant 0 : index
    %c0_4 = arith.constant 0 : index
    %3 = vector.load %arg3[%c0_3, %c0_4] : memref<1x192xf32, #tpu.memory_space<vmem>>, vector<1x192xf32>
    %4 = vector.broadcast %3 : vector<1x192xf32> to vector<8x192xf32>
    %5 = arith.addf %2, %4 : vector<8x192xf32>
    %6 = arith.truncf %5 : vector<8x192xf32> to vector<8x192xbf16>
    %c0_5 = arith.constant 0 : index
    %c0_6 = arith.constant 0 : index
    %7 = vector.load %arg4[%c0_5, %c0_6] : memref<192x400xbf16, #tpu.memory_space<vmem>>, vector<192x400xbf16>
    %cst_7 = arith.constant dense<0.000000e+00> : vector<8x400xf32>
    %8 = tpu.matmul %6, %7, %cst_7 {dimension_numbers = #tpu.dot_dimension_numbers<[1], [0], [0], [1], [0, 0, 1, 1], [], []>} : vector<8x192xbf16>, vector<192x400xbf16>, vector<8x400xf32> -> vector<8x400xf32>
    %c0_8 = arith.constant 0 : index
    %c0_9 = arith.constant 0 : index
    %9 = vector.load %arg5[%c0_8, %c0_9] : memref<1x400xf32, #tpu.memory_space<vmem>>, vector<1x400xf32>
    %10 = vector.broadcast %9 : vector<1x400xf32> to vector<8x400xf32>
    %11 = arith.addf %8, %10 : vector<8x400xf32>
    %cst_10 = arith.constant 0.000000e+00 : f32
    %12 = vector.broadcast %cst_10 : f32 to vector<8x400xf32>
    %13 = arith.cmpf ogt, %11, %12 : vector<8x400xf32>
    %cst_11 = arith.constant 1.000000e-01 : f32
    %14 = vector.broadcast %cst_11 : f32 to vector<8x400xf32>
    %15 = arith.mulf %14, %11 : vector<8x400xf32>
    %16 = arith.select %13, %11, %15 : vector<8x400xi1>, vector<8x400xf32>
    %17 = arith.truncf %16 : vector<8x400xf32> to vector<8x400xbf16>
    %c0_12 = arith.constant 0 : index
    %c0_13 = arith.constant 0 : index
    %18 = vector.load %arg6[%c0_12, %c0_13] : memref<400x50xbf16, #tpu.memory_space<vmem>>, vector<400x50xbf16>
    %cst_14 = arith.constant dense<0.000000e+00> : vector<8x50xf32>
    %19 = tpu.matmul %17, %18, %cst_14 {dimension_numbers = #tpu.dot_dimension_numbers<[1], [0], [0], [1], [0, 0, 1, 1], [], []>} : vector<8x400xbf16>, vector<400x50xbf16>, vector<8x50xf32> -> vector<8x50xf32>
    %c0_15 = arith.constant 0 : index
    %c0_16 = arith.constant 0 : index
    %20 = vector.load %arg7[%c0_15, %c0_16] : memref<1x50xf32, #tpu.memory_space<vmem>>, vector<1x50xf32>
    %21 = vector.broadcast %20 : vector<1x50xf32> to vector<8x50xf32>
    %22 = arith.addf %19, %21 : vector<8x50xf32>
    %cst_17 = arith.constant 0.000000e+00 : f32
    %23 = vector.broadcast %cst_17 : f32 to vector<8x50xf32>
    %24 = arith.cmpf ogt, %22, %23 : vector<8x50xf32>
    %cst_18 = arith.constant 1.000000e-01 : f32
    %25 = vector.broadcast %cst_18 : f32 to vector<8x50xf32>
    %26 = arith.mulf %25, %22 : vector<8x50xf32>
    %27 = arith.select %24, %22, %26 : vector<8x50xi1>, vector<8x50xf32>
    %c0_19 = arith.constant 0 : index
    %c0_20 = arith.constant 0 : index
    %28 = vector.load %arg8[%c0_19, %c0_20] : memref<50x128xf32, #tpu.memory_space<vmem>>, vector<50x128xf32>
    %cst_21 = arith.constant dense<0.000000e+00> : vector<8x128xf32>
    %29 = tpu.matmul %27, %28, %cst_21 {dimension_numbers = #tpu.dot_dimension_numbers<[1], [0], [0], [1], [0, 0, 1, 1], [], []>} : vector<8x50xf32>, vector<50x128xf32>, vector<8x128xf32> -> vector<8x128xf32>
    %c0_22 = arith.constant 0 : index
    %c0_23 = arith.constant 0 : index
    %30 = vector.load %arg9[%c0_22, %c0_23] : memref<1x128xf32, #tpu.memory_space<vmem>>, vector<1x128xf32>
    %31 = vector.broadcast %30 : vector<1x128xf32> to vector<8x128xf32>
    %32 = arith.addf %29, %31 : vector<8x128xf32>
    %cst_24 = arith.constant 0.000000e+00 : f32
    %33 = vector.broadcast %cst_24 : f32 to vector<8x128xf32>
    %34 = arith.cmpf ogt, %32, %33 : vector<8x128xf32>
    %cst_25 = arith.constant 1.000000e-01 : f32
    %35 = vector.broadcast %cst_25 : f32 to vector<8x128xf32>
    %36 = arith.mulf %35, %32 : vector<8x128xf32>
    %37 = arith.select %34, %32, %36 : vector<8x128xi1>, vector<8x128xf32>
    %c0_26 = arith.constant 0 : index
    %c0_27 = arith.constant 0 : index
    %38 = vector.load %arg10[%c0_26, %c0_27] : memref<8x128xf32, #tpu.memory_space<vmem>>, vector<8x128xf32>
    tpu.vector_store %arg10[%c0_26, %c0_27], %37 {strides = array<i32>} : memref<8x128xf32, #tpu.memory_space<vmem>>, vector<8x128xf32>,
    return
  }
  func.func @transform_0(%arg0: i32) -> (i32, i32) {
    %c0_i32 = arith.constant 0 : i32
    %c0_i32_0 = arith.constant 0 : i32
    return %arg0, %c0_i32 : i32, i32
  }
  func.func @transform_1(%arg0: i32) -> (i32, i32) {
    %c0_i32 = arith.constant 0 : i32
    %c0_i32_0 = arith.constant 0 : i32
    %c0_i32_1 = arith.constant 0 : i32
    return %c0_i32, %c0_i32_0 : i32, i32
  }
  func.func @transform_2(%arg0: i32) -> (i32, i32) {
    %c0_i32 = arith.constant 0 : i32
    %c0_i32_0 = arith.constant 0 : i32
    %c0_i32_1 = arith.constant 0 : i32
    return %c0_i32, %c0_i32_0 : i32, i32
  }
  func.func @transform_3(%arg0: i32) -> (i32, i32) {
    %c0_i32 = arith.constant 0 : i32
    %c0_i32_0 = arith.constant 0 : i32
    %c0_i32_1 = arith.constant 0 : i32
    return %c0_i32, %c0_i32_0 : i32, i32
  }
  func.func @transform_4(%arg0: i32) -> (i32, i32) {
    %c0_i32 = arith.constant 0 : i32
    %c0_i32_0 = arith.constant 0 : i32
    %c0_i32_1 = arith.constant 0 : i32
    return %c0_i32, %c0_i32_0 : i32, i32
  }
  func.func @transform_5(%arg0: i32) -> (i32, i32) {
    %c0_i32 = arith.constant 0 : i32
    %c0_i32_0 = arith.constant 0 : i32
    %c0_i32_1 = arith.constant 0 : i32
    return %c0_i32, %c0_i32_0 : i32, i32
  }
  func.func @transform_6(%arg0: i32) -> (i32, i32) {
    %c0_i32 = arith.constant 0 : i32
    %c0_i32_0 = arith.constant 0 : i32
    %c0_i32_1 = arith.constant 0 : i32
    return %c0_i32, %c0_i32_0 : i32, i32
  }
  func.func @transform_7(%arg0: i32) -> (i32, i32) {
    %c0_i32 = arith.constant 0 : i32
    %c0_i32_0 = arith.constant 0 : i32
    %c0_i32_1 = arith.constant 0 : i32
    return %c0_i32, %c0_i32_0 : i32, i32
  }
  func.func @transform_8(%arg0: i32) -> (i32, i32) {
    %c0_i32 = arith.constant 0 : i32
    %c0_i32_0 = arith.constant 0 : i32
    %c0_i32_1 = arith.constant 0 : i32
    return %c0_i32, %c0_i32_0 : i32, i32
  }
  func.func @transform_9(%arg0: i32) -> (i32, i32) {
    %c0_i32 = arith.constant 0 : i32
    %c0_i32_0 = arith.constant 0 : i32
    return %arg0, %c0_i32 : i32, i32
  }
}

</mosaic_0001>

<llo_original>
// kernel: forward_pallas.1
$region0: #{forward_pallas.1}
  #allocation0 [shape = 'u32[]', space=smem, size = 0x4, offset = 0x4, fixed_abs, tag = 'smem constant byte address 0x4 - core index']
  #allocation1 [shape = 'u32[144,128]{1,0:T(1,128)}', space=vmem, size = 0x12000, scoped, tag = 'internal scratch']
  %s0 = inlined_call_operand.vmem [shape: f32[8,16], index: 0, kind: input, shape index: {}]
  %s1 = inlined_call_operand.vmem [shape: f32[16,192], index: 1, kind: input, shape index: {}]
  %s2 = inlined_call_operand.vmem [shape: f32[1,192], index: 2, kind: input, shape index: {}]
  %s3 = inlined_call_operand.hbm [shape: bf16[192,400], index: 3, kind: input, shape index: {}]
  %s4 = inlined_call_operand.vmem [shape: f32[1,400], index: 4, kind: input, shape index: {}]
  %s5 = inlined_call_operand.vmem [shape: bf16[400,50], index: 5, kind: input, shape index: {}]
  %s6 = inlined_call_operand.vmem [shape: f32[1,50], index: 6, kind: input, shape index: {}]
  %s7 = inlined_call_operand.vmem [shape: f32[50,128], index: 7, kind: input, shape index: {}]
  %s8 = inlined_call_operand.vmem [shape: f32[1,128], index: 8, kind: input, shape index: {}]
  %s9 = inlined_call_operand.vmem [shape: f32[8,128], index: 9, kind: output, shape index: {}]
  %s10 = sld [smem:[#allocation0]]
  $region50: #{forward_pallas.1} parent=0
    _
  %s12 = ssub.s32 1, %s10
  %s13 = scalar_select 0, %s12, %s10
  $region1: #{forward_pallas.1} parent=0
    #allocation2 [shape = 'u8[196608]{0}', space=vmem, size = 0x30000, scoped, tag = 'input window, operand 3, single buffered']
    #allocation3 [shape = 's32[1]{0}', space=sflag, size = 0x4, scoped, tag = 'scoped memory for forward_pallas.1']
    %14 = vsyncpa [#allocation3], 0
    // Predicated region
    $region2: #{forward_pallas.1} parent=1 // pred_check
      _
    $region3: #{forward_pallas.1} parent=1 // pred_check_branch
      %16 = sbr.rel (0) target = $region5
    $region4: #{forward_pallas.1} parent=1 // pred_region
      _
    $region5: #{forward_pallas.1} parent=1 // pred_fallthru
      _
    // Predicated region
    $region6: #{forward_pallas.1} parent=1 // pred_check
      _
    $region7: #{forward_pallas.1} parent=1 // pred_check_branch
      %18 = sbr.rel (0) target = $region9
    $region8: #{forward_pallas.1} parent=1 // pred_region
      _
    $region9: #{forward_pallas.1} parent=1 // pred_fallthru
      _
    // Predicated region
    $region10: #{forward_pallas.1} parent=1 // pred_check
      _
    $region11: #{forward_pallas.1} parent=1 // pred_check_branch
      %20 = sbr.rel (0) target = $region13
    $region12: #{forward_pallas.1} parent=1 // pred_region
      _
    $region13: #{forward_pallas.1} parent=1 // pred_fallthru
      _
    // Predicated region
    $region14: #{forward_pallas.1} parent=1 // pred_check
      _
    $region15: #{forward_pallas.1} parent=1 // pred_check_branch
      %22 = sbr.rel (0) target = $region17
    $region16: #{forward_pallas.1} parent=1 // pred_region
      %s24 = ssub.s32 6144, 6144
      %25 = vsyncadd [#allocation3], %s24
      %s26 = sshll.u32 [#allocation2], 4
      %s27 = int_to_ptr.vmem [resolvable:$true] %s26
      %32 = dma.hbm_to_vmem [thread:$0]  %s3, 6144, %s27, [#allocation3], 256, 256, 16
    $region17: #{forward_pallas.1} parent=1 // pred_fallthru
      _
    // Predicated region
    $region18: #{forward_pallas.1} parent=1 // pred_check
      _
    $region19: #{forward_pallas.1} parent=1 // pred_check_branch
      %34 = sbr.rel (0) target = $region21
    $region20: #{forward_pallas.1} parent=1 // pred_region
      _
    $region21: #{forward_pallas.1} parent=1 // pred_fallthru
      _
    // Predicated region
    $region22: #{forward_pallas.1} parent=1 // pred_check
      _
    $region23: #{forward_pallas.1} parent=1 // pred_check_branch
      %36 = sbr.rel (0) target = $region25
    $region24: #{forward_pallas.1} parent=1 // pred_region
      _
    $region25: #{forward_pallas.1} parent=1 // pred_fallthru
      _
    // Predicated region
    $region26: #{forward_pallas.1} parent=1 // pred_check
      _
    $region27: #{forward_pallas.1} parent=1 // pred_check_branch
      %38 = sbr.rel (0) target = $region29
    $region28: #{forward_pallas.1} parent=1 // pred_region
      _
    $region29: #{forward_pallas.1} parent=1 // pred_fallthru
      _
    // Predicated region
    $region30: #{forward_pallas.1} parent=1 // pred_check
      _
    $region31: #{forward_pallas.1} parent=1 // pred_check_branch
      %40 = sbr.rel (0) target = $region33
    $region32: #{forward_pallas.1} parent=1 // pred_region
      _
    $region33: #{forward_pallas.1} parent=1 // pred_fallthru
      _
    // Predicated region
    $region34: #{forward_pallas.1} parent=1 // pred_check
      _
    $region35: #{forward_pallas.1} parent=1 // pred_check_branch
      %42 = sbr.rel (0) target = $region37
    $region36: #{forward_pallas.1} parent=1 // pred_region
      _
    $region37: #{forward_pallas.1} parent=1 // pred_fallthru
      _
    // Predicated region
    $region38: #{forward_pallas.1} parent=1 // pred_check
      _
    $region39: #{forward_pallas.1} parent=1 // pred_check_branch
      %44 = sbr.rel (0) target = $region41
    $region40: #{forward_pallas.1} parent=1 // pred_region
      %45 = dma.done [#allocation3], 6144
    $region41: #{forward_pallas.1} parent=1 // pred_fallthru
      _
    %v47 = vld [vmem:[%s0] sm:$0xff]
    %v48 = vld [vmem:[%s1] sm:$0xff]
    %v49 = vld [vmem:[%s1 + $0x8] sm:$0xff]
    %v50 = vld [vmem:[%s1 + $0x10] sm:$0xff]
    %v51 = vld [vmem:[%s1 + $0x18] sm:$0xff]
    %v52 = vld [vmem:[%s2] sm:$0x3]
    %v54 = vlaneseq
    %v55 = vshrl.u32 %v54, 7
    %v56 = vsub.s32 0, %v55
    %v57 = vrot.slane %v52, %v56
    %v58 = vlaneseq
    %v59 = vshrl.u32 %v58, 7
    %v60 = vsub.s32 1, %v59
    %v61 = vrot.slane %v52, %v60
    %vm64 = vcmask 130048
    %v66 = vsel %vm64, %v47, 0
    %68 = vmatprep.subr.mxu0 0.0
    %69 = vmatpush1.msra.mxu0 0.0
    %70 = vmatprep.subr.mxu0 0.0
    %71 = vmatpush1.msra.mxu0 0.0
    %72 = vmatprep.subr.mxu0 0.0
    %73 = vmatpush1.msra.mxu0 0.0
    %74 = vmatprep.subr.mxu0 0.0
    %75 = vmatpush1.msra.mxu0 0.0
    %76 = vmatprep.subr.mxu0 0.0
    %77 = vmatpush1.msra.mxu0 0.0
    %78 = vmatprep.subr.mxu0 0.0
    %79 = vmatpush1.msra.mxu0 0.0
    %80 = vmatprep.subr.mxu0 0.0
    %81 = vmatpush1.msra.mxu0 0.0
    %82 = vmatprep.subr.mxu0 0.0
    %83 = vmatpush1.msra.mxu0 0.0
    %84 = vmatprep.subr.mxu0 0.0
    %85 = vmatpush1.msra.mxu0 0.0
    %86 = vmatprep.subr.mxu0 0.0
    %87 = vmatpush1.msra.mxu0 0.0
    %88 = vmatprep.subr.mxu0 0.0
    %89 = vmatpush1.msra.mxu0 0.0
    %90 = vmatprep.subr.mxu0 0.0
    %91 = vmatpush1.msra.mxu0 0.0
    %92 = vmatprep.subr.mxu0 0.0
    %93 = vmatpush1.msra.mxu0 0.0
    %94 = vmatprep.subr.mxu0 0.0
    %95 = vmatpush1.msra.mxu0 0.0
    %96 = vmatprep.subr.mxu0 %v51
    %97 = vmatpush1.msra.mxu0 %v50
    %98 = vmatprep.subr.mxu0 %v49
    %99 = vmatpush1.msra.mxu0 %v48
    %100 = vmatprep.subr.mxu0 0.0
    %101 = vmatpush2.msra.mxu0 0.0
    %102 = vmatprep.subr.mxu0 0.0
    %103 = vmatpush2.msra.mxu0 0.0
    %104 = vmatprep.subr.mxu0 0.0
    %105 = vmatpush2.msra.mxu0 0.0
    %106 = vmatprep.subr.mxu0 0.0
    %107 = vmatpush2.msra.mxu0 0.0
    %108 = vmatprep.subr.mxu0 0.0
    %109 = vmatpush2.msra.mxu0 0.0
    %110 = vmatprep.subr.mxu0 0.0
    %111 = vmatpush2.msra.mxu0 0.0
    %112 = vmatprep.subr.mxu0 0.0
    %113 = vmatpush2.msra.mxu0 0.0
    %114 = vmatprep.subr.mxu0 0.0
    %115 = vmatpush2.msra.mxu0 0.0
    %116 = vmatprep.subr.mxu0 0.0
    %117 = vmatpush2.msra.mxu0 0.0
    %118 = vmatprep.subr.mxu0 0.0
    %119 = vmatpush2.msra.mxu0 0.0
    %120 = vmatprep.subr.mxu0 0.0
    %121 = vmatpush2.msra.mxu0 0.0
    %122 = vmatprep.subr.mxu0 0.0
    %123 = vmatpush2.msra.mxu0 0.0
    %124 = vmatprep.subr.mxu0 0.0
    %125 = vmatpush2.msra.mxu0 0.0
    %126 = vmatprep.subr.mxu0 0.0
    %127 = vmatpush2.msra.mxu0 0.0
    %128 = vmatprep.subr.mxu0 0.0
    %129 = vmatpush2.msra.mxu0 0.0
    %130 = vmatprep.subr.mxu0 0.0
    %131 = vmatpush2.msra.mxu0 0.0
    %132 = vmatprep.mubr.f32.mxu0 0.0
    %133 = vmatmul.mubr.f32.gmra.mxu0 %v66
    %v134 = vpop.f32.mrf.mxu0
    %v135 = vadd.f32 %v57, %v134
    %v136 = vpop.f32.mrf.mxu0
    %v137 = vadd.f32 %v61, %v136
    %138 = vdwg.mxu0
    %v139 = vpack.c.bf16 %v135, %v135
    %v140 = vpack.c.bf16 %v137, %v137
    %v141 = vld [vmem:[#allocation2] sm:$0xff]
    %v142 = vld [vmem:[#allocation2 + $0x8] sm:$0xff]
    %v143 = vld [vmem:[#allocation2 + $0x10] sm:$0xff]
    %v144 = vld [vmem:[#allocation2 + $0x18] sm:$0xff]
    %v145 = vld [vmem:[#allocation2 + $0x20] sm:$0xff]
    %v146 = vld [vmem:[#allocation2 + $0x28] sm:$0xff]
    %v147 = vld [vmem:[#allocation2 + $0x30] sm:$0xff]
    %v148 = vld [vmem:[#allocation2 + $0x38] sm:$0xff]
    %v149 = vld [vmem:[#allocation2 + $0x40] sm:$0xff]
    %v150 = vld [vmem:[#allocation2 + $0x48] sm:$0xff]
    %v151 = vld [vmem:[#allocation2 + $0x50] sm:$0xff]
    %v152 = vld [vmem:[#allocation2 + $0x58] sm:$0xff]
    %v153 = vld [vmem:[#allocation2 + $0x60] sm:$0xff]
    %v154 = vld [vmem:[#allocation2 + $0x68] sm:$0xff]
    %v155 = vld [vmem:[#allocation2 + $0x70] sm:$0xff]
    %v156 = vld [vmem:[#allocation2 + $0x78] sm:$0xff]
    %v157 = vld [vmem:[#allocation2 + $0x80] sm:$0xff]
    %v158 = vld [vmem:[#allocation2 + $0x88] sm:$0xff]
    %v159 = vld [vmem:[#allocation2 + $0x90] sm:$0xff]
    %v160 = vld [vmem:[#allocation2 + $0x98] sm:$0xff]
    %v161 = vld [vmem:[#allocation2 + $0xa0] sm:$0xff]
    %v162 = vld [vmem:[#allocation2 + $0xa8] sm:$0xff]
    %v163 = vld [vmem:[#allocation2 + $0xb0] sm:$0xff]
    %v164 = vld [vmem:[#allocation2 + $0xb8] sm:$0xff]
    %v165 = vld [vmem:[#allocation2 + $0xc0] sm:$0xff]
    %v166 = vld [vmem:[#allocation2 + $0xc8] sm:$0xff]
    %v167 = vld [vmem:[#allocation2 + $0xd0] sm:$0xff]
    %v168 = vld [vmem:[#allocation2 + $0xd8] sm:$0xff]
    %v169 = vld [vmem:[#allocation2 + $0xe0] sm:$0xff]
    %v170 = vld [vmem:[#allocation2 + $0xe8] sm:$0xff]
    %v171 = vld [vmem:[#allocation2 + $0xf0] sm:$0xff]
    %v172 = vld [vmem:[#allocation2 + $0xf8] sm:$0xff]
    %v173 = vld [vmem:[#allocation2 + $0x100] sm:$0xff]
    %v174 = vld [vmem:[#allocation2 + $0x108] sm:$0xff]
    %v175 = vld [vmem:[#allocation2 + $0x110] sm:$0xff]
    %v176 = vld [vmem:[#allocation2 + $0x118] sm:$0xff]
    %v177 = vld [vmem:[#allocation2 + $0x120] sm:$0xff]
    %v178 = vld [vmem:[#allocation2 + $0x128] sm:$0xff]
    %v179 = vld [vmem:[#allocation2 + $0x130] sm:$0xff]
    %v180 = vld [vmem:[#allocation2 + $0x138] sm:$0xff]
    %v181 = vld [vmem:[#allocation2 + $0x140] sm:$0xff]
    %v182 = vld [vmem:[#allocation2 + $0x148] sm:$0xff]
    %v183 = vld [vmem:[#allocation2 + $0x150] sm:$0xff]
    %v184 = vld [vmem:[#allocation2 + $0x158] sm:$0xff]
    %v185 = vld [vmem:[#allocation2 + $0x160] sm:$0xff]
    %v186 = vld [vmem:[#allocation2 + $0x168] sm:$0xff]
    %v187 = vld [vmem:[#allocation2 + $0x170] sm:$0xff]
    %v188 = vld [vmem:[#allocation2 + $0x178] sm:$0xff]
    %v189 = vld [vmem:[%s4] sm:$0xf]
    %v191 = vlaneseq
    %v192 = vshrl.u32 %v191, 7
    %v193 = vsub.s32 0, %v192
    %v194 = vrot.slane %v189, %v193
    %v195 = vlaneseq
    %v196 = vshrl.u32 %v195, 7
    %v197 = vsub.s32 1, %v196
    %v198 = vrot.slane %v189, %v197
    %v199 = vlaneseq
    %v200 = vshrl.u32 %v199, 7
    %v201 = vsub.s32 2, %v200
    %v202 = vrot.slane %v189, %v201
    %v203 = vlaneseq
    %v204 = vshrl.u32 %v203, 7
    %v205 = vsub.s32 3, %v204
    %v206 = vrot.slane %v189, %v205
    %v259 = vunpack.c.l.b16 %v141
    %v260 = vunpack.c.h.b16 %v141
    %v261 = vunpack.c.l.b16 %v142
    %v262 = vunpack.c.h.b16 %v142
    %v263 = vunpack.c.l.b16 %v143
    %v264 = vunpack.c.h.b16 %v143
    %v265 = vunpack.c.l.b16 %v144
    %v266 = vunpack.c.h.b16 %v144
    %v267 = vunpack.c.l.b16 %v145
    %v268 = vunpack.c.h.b16 %v145
    %v269 = vunpack.c.l.b16 %v146
    %v270 = vunpack.c.h.b16 %v146
    %v271 = vunpack.c.l.b16 %v147
    %v272 = vunpack.c.h.b16 %v147
    %v273 = vunpack.c.l.b16 %v148
    %v274 = vunpack.c.h.b16 %v148
    %v275 = vunpack.c.l.b16 %v149
    %v276 = vunpack.c.h.b16 %v149
    %v277 = vunpack.c.l.b16 %v150
    %v278 = vunpack.c.h.b16 %v150
    %v279 = vunpack.c.l.b16 %v151
    %v280 = vunpack.c.h.b16 %v151
    %v281 = vunpack.c.l.b16 %v152
    %v282 = vunpack.c.h.b16 %v152
    %v283 = vunpack.c.l.b16 %v153
    %v284 = vunpack.c.h.b16 %v153
    %v285 = vunpack.c.l.b16 %v154
    %v286 = vunpack.c.h.b16 %v154
    %v287 = vunpack.c.l.b16 %v155
    %v288 = vunpack.c.h.b16 %v155
    %v289 = vunpack.c.l.b16 %v156
    %v290 = vunpack.c.h.b16 %v156
    %v291 = vunpack.c.l.b16 %v157
    %v292 = vunpack.c.h.b16 %v157
    %v293 = vunpack.c.l.b16 %v158
    %v294 = vunpack.c.h.b16 %v158
    %v295 = vunpack.c.l.b16 %v159
    %v296 = vunpack.c.h.b16 %v159
    %v297 = vunpack.c.l.b16 %v160
    %v298 = vunpack.c.h.b16 %v160
    %v299 = vunpack.c.l.b16 %v161
    %v300 = vunpack.c.h.b16 %v161
    %v301 = vunpack.c.l.b16 %v162
    %v302 = vunpack.c.h.b16 %v162
    %v303 = vunpack.c.l.b16 %v163
    %v304 = vunpack.c.h.b16 %v163
    %v305 = vunpack.c.l.b16 %v164
    %v306 = vunpack.c.h.b16 %v164
    %v307 = vunpack.c.l.b16 %v165
    %v308 = vunpack.c.h.b16 %v165
    %v309 = vunpack.c.l.b16 %v166
    %v310 = vunpack.c.h.b16 %v166
    %v311 = vunpack.c.l.b16 %v167
    %v312 = vunpack.c.h.b16 %v167
    %v313 = vunpack.c.l.b16 %v168
    %v314 = vunpack.c.h.b16 %v168
    %v315 = vunpack.c.l.b16 %v169
    %v316 = vunpack.c.h.b16 %v169
    %v317 = vunpack.c.l.b16 %v170
    %v318 = vunpack.c.h.b16 %v170
    %v319 = vunpack.c.l.b16 %v171
    %v320 = vunpack.c.h.b16 %v171
    %v321 = vunpack.c.l.b16 %v172
    %v322 = vunpack.c.h.b16 %v172
    %v323 = vunpack.c.l.b16 %v173
    %v324 = vunpack.c.h.b16 %v173
    %v325 = vunpack.c.l.b16 %v174
    %v326 = vunpack.c.h.b16 %v174
    %v327 = vunpack.c.l.b16 %v175
    %v328 = vunpack.c.h.b16 %v175
    %v329 = vunpack.c.l.b16 %v176
    %v330 = vunpack.c.h.b16 %v176
    %v331 = vunpack.c.l.b16 %v177
    %v332 = vunpack.c.h.b16 %v177
    %v333 = vunpack.c.l.b16 %v178
    %v334 = vunpack.c.h.b16 %v178
    %v335 = vunpack.c.l.b16 %v179
    %v336 = vunpack.c.h.b16 %v179
    %v337 = vunpack.c.l.b16 %v180
    %v338 = vunpack.c.h.b16 %v180
    %v339 = vunpack.c.l.b16 %v181
    %v340 = vunpack.c.h.b16 %v181
    %v341 = vunpack.c.l.b16 %v182
    %v342 = vunpack.c.h.b16 %v182
    %v343 = vunpack.c.l.b16 %v183
    %v344 = vunpack.c.h.b16 %v183
    %v345 = vunpack.c.l.b16 %v184
    %v346 = vunpack.c.h.b16 %v184
    %v347 = vunpack.c.l.b16 %v185
    %v348 = vunpack.c.h.b16 %v185
    %v349 = vunpack.c.l.b16 %v186
    %v350 = vunpack.c.h.b16 %v186
    %v351 = vunpack.c.l.b16 %v187
    %v352 = vunpack.c.h.b16 %v187
    %v353 = vunpack.c.l.b16 %v188
    %v354 = vunpack.c.h.b16 %v188
    %v355 = vpack.c.b16 %v263, %v259
    %v356 = vpack.c.b16 %v264, %v260
    %v357 = vpack.c.b16 %v265, %v261
    %v358 = vpack.c.b16 %v266, %v262
    %v359 = vpack.c.b16 %v271, %v267
    %v360 = vpack.c.b16 %v272, %v268
    %v361 = vpack.c.b16 %v273, %v269
    %v362 = vpack.c.b16 %v274, %v270
    %v363 = vpack.c.b16 %v279, %v275
    %v364 = vpack.c.b16 %v280, %v276
    %v365 = vpack.c.b16 %v281, %v277
    %v366 = vpack.c.b16 %v282, %v278
    %v367 = vpack.c.b16 %v287, %v283
    %v368 = vpack.c.b16 %v288, %v284
    %v369 = vpack.c.b16 %v289, %v285
    %v370 = vpack.c.b16 %v290, %v286
    %v371 = vpack.c.b16 %v295, %v291
    %v372 = vpack.c.b16 %v296, %v292
    %v373 = vpack.c.b16 %v297, %v293
    %v374 = vpack.c.b16 %v298, %v294
    %v375 = vpack.c.b16 %v303, %v299
    %v376 = vpack.c.b16 %v304, %v300
    %v377 = vpack.c.b16 %v305, %v301
    %v378 = vpack.c.b16 %v306, %v302
    %v379 = vpack.c.b16 %v311, %v307
    %v380 = vpack.c.b16 %v312, %v308
    %v381 = vpack.c.b16 %v313, %v309
    %v382 = vpack.c.b16 %v314, %v310
    %v383 = vpack.c.b16 %v319, %v315
    %v384 = vpack.c.b16 %v320, %v316
    %v385 = vpack.c.b16 %v321, %v317
    %v386 = vpack.c.b16 %v322, %v318
    %v387 = vpack.c.b16 %v327, %v323
    %v388 = vpack.c.b16 %v328, %v324
    %v389 = vpack.c.b16 %v329, %v325
    %v390 = vpack.c.b16 %v330, %v326
    %v391 = vpack.c.b16 %v335, %v331
    %v392 = vpack.c.b16 %v336, %v332
    %v393 = vpack.c.b16 %v337, %v333
    %v394 = vpack.c.b16 %v338, %v334
    %v395 = vpack.c.b16 %v343, %v339
    %v396 = vpack.c.b16 %v344, %v340
    %v397 = vpack.c.b16 %v345, %v341
    %v398 = vpack.c.b16 %v346, %v342
    %v399 = vpack.c.b16 %v351, %v347
    %v400 = vpack.c.b16 %v352, %v348
    %v401 = vpack.c.b16 %v353, %v349
    %v402 = vpack.c.b16 %v354, %v350
    %vm451 = vcmask 523264
    %v453 = vsel %vm451, %v140, 0
    %455 = vmatprep.subr.bf16.mxu0 %v384
    %456 = vmatpush1.bf16.msra.mxu0 %v383
    %457 = vmatprep.subr.bf16.mxu0 %v380
    %458 = vmatpush1.bf16.msra.mxu0 %v379
    %459 = vmatprep.subr.bf16.mxu0 %v376
    %460 = vmatpush1.bf16.msra.mxu0 %v375
    %461 = vmatprep.subr.bf16.mxu0 %v372
    %462 = vmatpush1.bf16.msra.mxu0 %v371
    %463 = vmatprep.subr.bf16.mxu0 %v368
    %464 = vmatpush1.bf16.msra.mxu0 %v367
    %465 = vmatprep.subr.bf16.mxu0 %v364
    %466 = vmatpush1.bf16.msra.mxu0 %v363
    %467 = vmatprep.subr.bf16.mxu0 %v360
    %468 = vmatpush1.bf16.msra.mxu0 %v359
    %469 = vmatprep.subr.bf16.mxu0 %v356
    %470 = vmatpush1.bf16.msra.mxu0 %v355
    %471 = vmatprep.subr.bf16.mxu0 0
    %472 = vmatpush2.bf16.msra.mxu0 0
    %473 = vmatprep.subr.bf16.mxu0 0
    %474 = vmatpush2.bf16.msra.mxu0 0
    %475 = vmatprep.subr.bf16.mxu0 0
    %476 = vmatpush2.bf16.msra.mxu0 0
    %477 = vmatprep.subr.bf16.mxu0 0
    %478 = vmatpush2.bf16.msra.mxu0 0
    %479 = vmatprep.subr.bf16.mxu0 %v400
    %480 = vmatpush2.bf16.msra.mxu0 %v399
    %481 = vmatprep.subr.bf16.mxu0 %v396
    %482 = vmatpush2.bf16.msra.mxu0 %v395
    %483 = vmatprep.subr.bf16.mxu0 %v392
    %484 = vmatpush2.bf16.msra.mxu0 %v391
    %485 = vmatprep.subr.bf16.mxu0 %v388
    %486 = vmatpush2.bf16.msra.mxu0 %v387
    %487 = vmatprep.mubr.bf16.mxu0 %v453
    %488 = vmatmul.mubr.bf16.gmra.mxu0 %v139
    %v489 = vpop.f32.mrf.mxu0
    %v490 = vadd.f32 %v194, %v489
    %v491 = vpop.f32.mrf.mxu0
    %v492 = vadd.f32 %v198, %v491
    %v493 = vpop.f32.mrf.mxu0
    %v494 = vpop.f32.mrf.mxu0
    %495 = vdwg.mxu0
    %496 = vmatprep.subr.bf16.mxu0 %v386
    %497 = vmatpush1.bf16.msra.mxu0 %v385
    %498 = vmatprep.subr.bf16.mxu0 %v382
    %499 = vmatpush1.bf16.msra.mxu0 %v381
    %500 = vmatprep.subr.bf16.mxu0 %v378
    %501 = vmatpush1.bf16.msra.mxu0 %v377
    %502 = vmatprep.subr.bf16.mxu0 %v374
    %503 = vmatpush1.bf16.msra.mxu0 %v373
    %504 = vmatprep.subr.bf16.mxu0 %v370
    %505 = vmatpush1.bf16.msra.mxu0 %v369
    %506 = vmatprep.subr.bf16.mxu0 %v366
    %507 = vmatpush1.bf16.msra.mxu0 %v365
    %508 = vmatprep.subr.bf16.mxu0 %v362
    %509 = vmatpush1.bf16.msra.mxu0 %v361
    %510 = vmatprep.subr.bf16.mxu0 %v358
    %511 = vmatpush1.bf16.msra.mxu0 %v357
    %512 = vmatprep.subr.bf16.mxu0 0
    %513 = vmatpush2.bf16.msra.mxu0 0
    %514 = vmatprep.subr.bf16.mxu0 0
    %515 = vmatpush2.bf16.msra.mxu0 0
    %516 = vmatprep.subr.bf16.mxu0 0
    %517 = vmatpush2.bf16.msra.mxu0 0
    %518 = vmatprep.subr.bf16.mxu0 0
    %519 = vmatpush2.bf16.msra.mxu0 0
    %520 = vmatprep.subr.bf16.mxu0 %v402
    %521 = vmatpush2.bf16.msra.mxu0 %v401
    %522 = vmatprep.subr.bf16.mxu0 %v398
    %523 = vmatpush2.bf16.msra.mxu0 %v397
    %524 = vmatprep.subr.bf16.mxu0 %v394
    %525 = vmatpush2.bf16.msra.mxu0 %v393
    %526 = vmatprep.subr.bf16.mxu0 %v390
    %527 = vmatpush2.bf16.msra.mxu0 %v389
    %528 = vmatprep.mubr.bf16.mxu0 %v453
    %529 = vmatmul.mubr.bf16.gmra.mxu0 %v139
    %v530 = vpop.f32.mrf.mxu0
    %v531 = vadd.f32 %v202, %v530
    %v532 = vpop.f32.mrf.mxu0
    %v533 = vadd.f32 %v206, %v532
    %v534 = vpop.f32.mrf.mxu0
    %v535 = vpop.f32.mrf.mxu0
    %536 = vdwg.mxu0
    %vm537 = vcmp.gt.f32.partialorder %v490, 0.0
    %vm538 = vcmp.gt.f32.partialorder %v492, 0.0
    %vm539 = vcmp.gt.f32.partialorder %v531, 0.0
    %vm540 = vcmp.gt.f32.partialorder %v533, 0.0
    %v541 = vmul.f32 %v490, 0.1
    %v542 = vmul.f32 %v492, 0.1
    %v543 = vmul.f32 %v531, 0.1
    %v544 = vmul.f32 %v533, 0.1
    %v545 = vsel %vm537, %v490, %v541
    %v546 = vsel %vm538, %v492, %v542
    %v547 = vsel %vm539, %v531, %v543
    %v548 = vsel %vm540, %v533, %v544
    %v549 = vpack.c.bf16 %v545, %v545
    %v550 = vpack.c.bf16 %v546, %v546
    %v551 = vpack.c.bf16 %v547, %v547
    %v552 = vpack.c.bf16 %v548, %v548
    %v553 = vld [vmem:[%s5] sm:$0xf]
    %v554 = vld [vmem:[%s5 + $0x4] sm:$0xf]
    %v555 = vld [vmem:[%s5 + $0x8] sm:$0xf]
    %v556 = vld [vmem:[%s5 + $0xc] sm:$0xf]
    %v557 = vld [vmem:[%s5 + $0x10] sm:$0xf]
    %v558 = vld [vmem:[%s5 + $0x14] sm:$0xf]
    %v559 = vld [vmem:[%s5 + $0x18] sm:$0xf]
    %v560 = vld [vmem:[%s5 + $0x1c] sm:$0xf]
    %v561 = vld [vmem:[%s5 + $0x20] sm:$0xf]
    %v562 = vld [vmem:[%s5 + $0x24] sm:$0xf]
    %v563 = vld [vmem:[%s5 + $0x28] sm:$0xf]
    %v564 = vld [vmem:[%s5 + $0x2c] sm:$0xf]
    %v565 = vld [vmem:[%s5 + $0x30] sm:$0xf]
    %v566 = vld [vmem:[%s5 + $0x34] sm:$0xf]
    %v567 = vld [vmem:[%s5 + $0x38] sm:$0xf]
    %v568 = vld [vmem:[%s5 + $0x3c] sm:$0xf]
    %v569 = vld [vmem:[%s5 + $0x40] sm:$0xf]
    %v570 = vld [vmem:[%s5 + $0x44] sm:$0xf]
    %v571 = vld [vmem:[%s5 + $0x48] sm:$0xf]
    %v572 = vld [vmem:[%s5 + $0x4c] sm:$0xf]
    %v573 = vld [vmem:[%s5 + $0x50] sm:$0xf]
    %v574 = vld [vmem:[%s5 + $0x54] sm:$0xf]
    %v575 = vld [vmem:[%s5 + $0x58] sm:$0xf]
    %v576 = vld [vmem:[%s5 + $0x5c] sm:$0xf]
    %v577 = vld [vmem:[%s5 + $0x60] sm:$0xf]
    %v578 = vld [vmem:[%s5 + $0x64] sm:$0xf]
    %v579 = vld [vmem:[%s5 + $0x68] sm:$0xf]
    %v580 = vld [vmem:[%s5 + $0x6c] sm:$0xf]
    %v581 = vld [vmem:[%s5 + $0x70] sm:$0xf]
    %v582 = vld [vmem:[%s5 + $0x74] sm:$0xf]
    %v583 = vld [vmem:[%s5 + $0x78] sm:$0xf]
    %v584 = vld [vmem:[%s5 + $0x7c] sm:$0xf]
    %v585 = vld [vmem:[%s5 + $0x80] sm:$0xf]
    %v586 = vld [vmem:[%s5 + $0x84] sm:$0xf]
    %v587 = vld [vmem:[%s5 + $0x88] sm:$0xf]
    %v588 = vld [vmem:[%s5 + $0x8c] sm:$0xf]
    %v589 = vld [vmem:[%s5 + $0x90] sm:$0xf]
    %v590 = vld [vmem:[%s5 + $0x94] sm:$0xf]
    %v591 = vld [vmem:[%s5 + $0x98] sm:$0xf]
    %v592 = vld [vmem:[%s5 + $0x9c] sm:$0xf]
    %v593 = vld [vmem:[%s5 + $0xa0] sm:$0xf]
    %v594 = vld [vmem:[%s5 + $0xa4] sm:$0xf]
    %v595 = vld [vmem:[%s5 + $0xa8] sm:$0xf]
    %v596 = vld [vmem:[%s5 + $0xac] sm:$0xf]
    %v597 = vld [vmem:[%s5 + $0xb0] sm:$0xf]
    %v598 = vld [vmem:[%s5 + $0xb4] sm:$0xf]
    %v599 = vld [vmem:[%s5 + $0xb8] sm:$0xf]
    %v600 = vld [vmem:[%s5 + $0xbc] sm:$0xf]
    %v601 = vld [vmem:[%s5 + $0xc0] sm:$0xf]
    %v602 = vld [vmem:[%s5 + $0xc4] sm:$0xf]
    %v603 = vld [vmem:[%s6] sm:$0x1]
    %v605 = vlaneseq
    %v606 = vshrl.u32 %v605, 7
    %v607 = vsub.s32 0, %v606
    %v608 = vrot.slane %v603, %v607
    %v660 = vunpack.c.l.b16 %v553
    %v661 = vunpack.c.l.b16 %v554
    %v662 = vunpack.c.l.b16 %v555
    %v663 = vunpack.c.l.b16 %v556
    %v664 = vunpack.c.l.b16 %v557
    %v665 = vunpack.c.l.b16 %v558
    %v666 = vunpack.c.l.b16 %v559
    %v667 = vunpack.c.l.b16 %v560
    %v668 = vunpack.c.l.b16 %v561
    %v669 = vunpack.c.l.b16 %v562
    %v670 = vunpack.c.l.b16 %v563
    %v671 = vunpack.c.l.b16 %v564
    %v672 = vunpack.c.l.b16 %v565
    %v673 = vunpack.c.l.b16 %v566
    %v674 = vunpack.c.l.b16 %v567
    %v675 = vunpack.c.l.b16 %v568
    %v676 = vunpack.c.l.b16 %v569
    %v677 = vunpack.c.l.b16 %v570
    %v678 = vunpack.c.l.b16 %v571
    %v679 = vunpack.c.l.b16 %v572
    %v680 = vunpack.c.l.b16 %v573
    %v681 = vunpack.c.l.b16 %v574
    %v682 = vunpack.c.l.b16 %v575
    %v683 = vunpack.c.l.b16 %v576
    %v684 = vunpack.c.l.b16 %v577
    %v685 = vunpack.c.l.b16 %v578
    %v686 = vunpack.c.l.b16 %v579
    %v687 = vunpack.c.l.b16 %v580
    %v688 = vunpack.c.l.b16 %v581
    %v689 = vunpack.c.l.b16 %v582
    %v690 = vunpack.c.l.b16 %v583
    %v691 = vunpack.c.l.b16 %v584
    %v692 = vunpack.c.l.b16 %v585
    %v693 = vunpack.c.l.b16 %v586
    %v694 = vunpack.c.l.b16 %v587
    %v695 = vunpack.c.l.b16 %v588
    %v696 = vunpack.c.l.b16 %v589
    %v697 = vunpack.c.l.b16 %v590
    %v698 = vunpack.c.l.b16 %v591
    %v699 = vunpack.c.l.b16 %v592
    %v700 = vunpack.c.l.b16 %v593
    %v701 = vunpack.c.l.b16 %v594
    %v702 = vunpack.c.l.b16 %v595
    %v703 = vunpack.c.l.b16 %v596
    %v704 = vunpack.c.l.b16 %v597
    %v705 = vunpack.c.l.b16 %v598
    %v706 = vunpack.c.l.b16 %v599
    %v707 = vunpack.c.l.b16 %v600
    %v708 = vunpack.c.l.b16 %v601
    %v709 = vunpack.c.l.b16 %v602
    %v710 = vpack.c.b16 %v661, %v660
    %v711 = vpack.c.b16 %v663, %v662
    %v712 = vpack.c.b16 %v665, %v664
    %v713 = vpack.c.b16 %v667, %v666
    %v714 = vpack.c.b16 %v669, %v668
    %v715 = vpack.c.b16 %v671, %v670
    %v716 = vpack.c.b16 %v673, %v672
    %v717 = vpack.c.b16 %v675, %v674
    %v718 = vpack.c.b16 %v677, %v676
    %v719 = vpack.c.b16 %v679, %v678
    %v720 = vpack.c.b16 %v681, %v680
    %v721 = vpack.c.b16 %v683, %v682
    %v722 = vpack.c.b16 %v685, %v684
    %v723 = vpack.c.b16 %v687, %v686
    %v724 = vpack.c.b16 %v689, %v688
    %v725 = vpack.c.b16 %v691, %v690
    %v726 = vpack.c.b16 %v693, %v692
    %v727 = vpack.c.b16 %v695, %v694
    %v728 = vpack.c.b16 %v697, %v696
    %v729 = vpack.c.b16 %v699, %v698
    %v730 = vpack.c.b16 %v701, %v700
    %v731 = vpack.c.b16 %v703, %v702
    %v732 = vpack.c.b16 %v705, %v704
    %v733 = vpack.c.b16 %v707, %v706
    %v734 = vpack.c.b16 %v709, %v708
    %v761 = vsel %vm64, %v552, 0
    %763 = vmatprep.subr.bf16.mxu0 0
    %764 = vmatpush1.bf16.msra.mxu0 %v717
    %765 = vmatprep.subr.bf16.mxu0 0
    %766 = vmatpush1.bf16.msra.mxu0 %v716
    %767 = vmatprep.subr.bf16.mxu0 0
    %768 = vmatpush1.bf16.msra.mxu0 %v715
    %769 = vmatprep.subr.bf16.mxu0 0
    %770 = vmatpush1.bf16.msra.mxu0 %v714
    %771 = vmatprep.subr.bf16.mxu0 0
    %772 = vmatpush1.bf16.msra.mxu0 %v713
    %773 = vmatprep.subr.bf16.mxu0 0
    %774 = vmatpush1.bf16.msra.mxu0 %v712
    %775 = vmatprep.subr.bf16.mxu0 0
    %776 = vmatpush1.bf16.msra.mxu0 %v711
    %777 = vmatprep.subr.bf16.mxu0 0
    %778 = vmatpush1.bf16.msra.mxu0 %v710
    %779 = vmatprep.subr.bf16.mxu0 0
    %780 = vmatpush2.bf16.msra.mxu0 %v725
    %781 = vmatprep.subr.bf16.mxu0 0
    %782 = vmatpush2.bf16.msra.mxu0 %v724
    %783 = vmatprep.subr.bf16.mxu0 0
    %784 = vmatpush2.bf16.msra.mxu0 %v723
    %785 = vmatprep.subr.bf16.mxu0 0
    %786 = vmatpush2.bf16.msra.mxu0 %v722
    %787 = vmatprep.subr.bf16.mxu0 0
    %788 = vmatpush2.bf16.msra.mxu0 %v721
    %789 = vmatprep.subr.bf16.mxu0 0
    %790 = vmatpush2.bf16.msra.mxu0 %v720
    %791 = vmatprep.subr.bf16.mxu0 0
    %792 = vmatpush2.bf16.msra.mxu0 %v719
    %793 = vmatprep.subr.bf16.mxu0 0
    %794 = vmatpush2.bf16.msra.mxu0 %v718
    %795 = vmatprep.mubr.bf16.mxu0 %v550
    %796 = vmatmul.mubr.bf16.gmra.mxu0 %v549
    %v797 = vpop.f32.mrf.mxu0
    %v798 = vadd.f32 %v608, %v797
    %v799 = vpop.f32.mrf.mxu0
    %v800 = vpop.f32.mrf.mxu0
    %v801 = vpop.f32.mrf.mxu0
    %802 = vdwg.mxu0
    %803 = vmatprep.subr.bf16.mxu0 0
    %804 = vmatpush1.bf16.msra.mxu0 %v733
    %805 = vmatprep.subr.bf16.mxu0 0
    %806 = vmatpush1.bf16.msra.mxu0 %v732
    %807 = vmatprep.subr.bf16.mxu0 0
    %808 = vmatpush1.bf16.msra.mxu0 %v731
    %809 = vmatprep.subr.bf16.mxu0 0
    %810 = vmatpush1.bf16.msra.mxu0 %v730
    %811 = vmatprep.subr.bf16.mxu0 0
    %812 = vmatpush1.bf16.msra.mxu0 %v729
    %813 = vmatprep.subr.bf16.mxu0 0
    %814 = vmatpush1.bf16.msra.mxu0 %v728
    %815 = vmatprep.subr.bf16.mxu0 0
    %816 = vmatpush1.bf16.msra.mxu0 %v727
    %817 = vmatprep.subr.bf16.mxu0 0
    %818 = vmatpush1.bf16.msra.mxu0 %v726
    %819 = vmatprep.subr.bf16.mxu0 0
    %820 = vmatpush2.bf16.msra.mxu0 0
    %821 = vmatprep.subr.bf16.mxu0 0
    %822 = vmatpush2.bf16.msra.mxu0 0
    %823 = vmatprep.subr.bf16.mxu0 0
    %824 = vmatpush2.bf16.msra.mxu0 0
    %825 = vmatprep.subr.bf16.mxu0 0
    %826 = vmatpush2.bf16.msra.mxu0 0
    %827 = vmatprep.subr.bf16.mxu0 0
    %828 = vmatpush2.bf16.msra.mxu0 0
    %829 = vmatprep.subr.bf16.mxu0 0
    %830 = vmatpush2.bf16.msra.mxu0 0
    %831 = vmatprep.subr.bf16.mxu0 0
    %832 = vmatpush2.bf16.msra.mxu0 0
    %833 = vmatprep.subr.bf16.mxu0 0
    %834 = vmatpush2.bf16.msra.mxu0 %v734
    %835 = vmatprep.mubr.bf16.mxu0 %v761
    %836 = vmatmul.mubr.bf16.gmra.mxu0 %v551
    %v837 = vpop.f32.mrf.mxu0
    %v838 = vadd.f32 %v798, %v837
    %v839 = vpop.f32.mrf.mxu0
    %v840 = vpop.f32.mrf.mxu0
    %v841 = vpop.f32.mrf.mxu0
    %842 = vdwg.mxu0
    %vm843 = vcmp.gt.f32.partialorder %v838, 0.0
    %v844 = vmul.f32 %v838, 0.1
    %v845 = vsel %vm843, %v838, %v844
    %v846 = vld [vmem:[%s7] sm:$0xff]
    %v847 = vld [vmem:[%s7 + $0x8] sm:$0xff]
    %v848 = vld [vmem:[%s7 + $0x10] sm:$0xff]
    %v849 = vld [vmem:[%s7 + $0x18] sm:$0xff]
    %v850 = vld [vmem:[%s7 + $0x20] sm:$0xff]
    %v851 = vld [vmem:[%s7 + $0x28] sm:$0xff]
    %v852 = vld [vmem:[%s7 + $0x30] sm:$0x3]
    %v853 = vld [vmem:[%s8] sm:$0x1]
    %v855 = vlaneseq
    %v856 = vshrl.u32 %v855, 7
    %v857 = vsub.s32 0, %v856
    %v858 = vrot.slane %v853, %v857
    %vm860 = vcmask 408576
    %v862 = vsel %vm860, %v845, 0
    %vm864 = vcmask 1041408
    %v866 = vsel %vm864, %v852, 0
    %868 = vmatprep.subr.mxu0 0.0
    %869 = vmatpush1.msra.mxu0 0.0
    %870 = vmatprep.subr.mxu0 0.0
    %871 = vmatpush1.msra.mxu0 0.0
    %872 = vmatprep.subr.mxu0 0.0
    %873 = vmatpush1.msra.mxu0 0.0
    %874 = vmatprep.subr.mxu0 0.0
    %875 = vmatpush1.msra.mxu0 0.0
    %876 = vmatprep.subr.mxu0 0.0
    %877 = vmatpush1.msra.mxu0 0.0
    %878 = vmatprep.subr.mxu0 0.0
    %879 = vmatpush1.msra.mxu0 0.0
    %880 = vmatprep.subr.mxu0 0.0
    %881 = vmatpush1.msra.mxu0 0.0
    %882 = vmatprep.subr.mxu0 0.0
    %883 = vmatpush1.msra.mxu0 0.0
    %884 = vmatprep.subr.mxu0 0.0
    %885 = vmatpush1.msra.mxu0 0.0
    %886 = vmatprep.subr.mxu0 0.0
    %887 = vmatpush1.msra.mxu0 %v866
    %888 = vmatprep.subr.mxu0 0.0
    %889 = vmatpush1.msra.mxu0 %v851
    %890 = vmatprep.subr.mxu0 0.0
    %891 = vmatpush1.msra.mxu0 %v850
    %892 = vmatprep.subr.mxu0 0.0
    %893 = vmatpush1.msra.mxu0 %v849
    %894 = vmatprep.subr.mxu0 0.0
    %895 = vmatpush1.msra.mxu0 %v848
    %896 = vmatprep.subr.mxu0 0.0
    %897 = vmatpush1.msra.mxu0 %v847
    %898 = vmatprep.subr.mxu0 0.0
    %899 = vmatpush1.msra.mxu0 %v846
    %900 = vmatprep.subr.mxu0 0.0
    %901 = vmatpush2.msra.mxu0 0.0
    %902 = vmatprep.subr.mxu0 0.0
    %903 = vmatpush2.msra.mxu0 0.0
    %904 = vmatprep.subr.mxu0 0.0
    %905 = vmatpush2.msra.mxu0 0.0
    %906 = vmatprep.subr.mxu0 0.0
    %907 = vmatpush2.msra.mxu0 0.0
    %908 = vmatprep.subr.mxu0 0.0
    %909 = vmatpush2.msra.mxu0 0.0
    %910 = vmatprep.subr.mxu0 0.0
    %911 = vmatpush2.msra.mxu0 0.0
    %912 = vmatprep.subr.mxu0 0.0
    %913 = vmatpush2.msra.mxu0 0.0
    %914 = vmatprep.subr.mxu0 0.0
    %915 = vmatpush2.msra.mxu0 0.0
    %916 = vmatprep.subr.mxu0 0.0
    %917 = vmatpush2.msra.mxu0 0.0
    %918 = vmatprep.subr.mxu0 0.0
    %919 = vmatpush2.msra.mxu0 0.0
    %920 = vmatprep.subr.mxu0 0.0
    %921 = vmatpush2.msra.mxu0 0.0
    %922 = vmatprep.subr.mxu0 0.0
    %923 = vmatpush2.msra.mxu0 0.0
    %924 = vmatprep.subr.mxu0 0.0
    %925 = vmatpush2.msra.mxu0 0.0
    %926 = vmatprep.subr.mxu0 0.0
    %927 = vmatpush2.msra.mxu0 0.0
    %928 = vmatprep.subr.mxu0 0.0
    %929 = vmatpush2.msra.mxu0 0.0
    %930 = vmatprep.subr.mxu0 0.0
    %931 = vmatpush2.msra.mxu0 0.0
    %932 = vmatprep.mubr.f32.mxu0 0.0
    %933 = vmatmul.mubr.f32.gmra.mxu0 %v862
    %v934 = vpop.f32.mrf.mxu0
    %v935 = vadd.f32 %v858, %v934
    %v936 = vpop.f32.mrf.mxu0
    %937 = vdwg.mxu0
    %vm938 = vcmp.gt.f32.partialorder %v935, 0.0
    %v939 = vmul.f32 %v935, 0.1
    %v940 = vsel %vm938, %v935, %v939
    %941 = vst [vmem:[%s9] sm:$0xff] %v940
    // Predicated region
    $region42: #{forward_pallas.1} parent=1 // pred_check
      _
    $region43: #{forward_pallas.1} parent=1 // pred_check_branch
      %943 = sbr.rel (0) target = $region45
    $region44: #{forward_pallas.1} parent=1 // pred_region
      _
    $region45: #{forward_pallas.1} parent=1 // pred_fallthru
      _
    // Predicated region
    $region46: #{forward_pallas.1} parent=1 // pred_check
      _
    $region47: #{forward_pallas.1} parent=1 // pred_check_branch
      %945 = sbr.rel (0) target = $region49
    $region48: #{forward_pallas.1} parent=1 // pred_region
      _
    $region49: #{forward_pallas.1} parent=1 // pred_fallthru
      _
    %946 = vsyncpa [#allocation3], 1

</llo_original>
